<compile_context>
chip_gen: v6e
topology: v6e:2x2x1
jax: 0.10.0
libtpu: 0.0.40
codegen_flags: <defaults>
</compile_context>

<pallas_src>
import jax
import jax.numpy as jnp
from jax.experimental import pallas as pl
from jax.experimental.pallas import tpu as pltpu

ORDERING = (1, 0, 2, 3)  # (C, T, H, W) -> (T, C, H, W)


def _copy_kernel(x_ref, o_ref):
    # Pure block copy: the (C, T) swap is encoded entirely in the BlockSpec
    # index maps plus the wrapper-side (free) reshapes.
    o_ref[...] = x_ref[...]


def _ceil_div(a, b):
    return -(-a // b)


def _sublane(dtype):
    # Native sublane tile for the dtype (8 for f32, 16 for bf16, 32 for int8/fp8).
    return max(8, 32 // jnp.dtype(dtype).itemsize)


def _vmem_capacity_bytes():
    try:
        return int(pltpu.get_tpu_info().vmem_capacity_bytes)
    except Exception:
        # Interpret mode / API mismatch: assume the smallest (v7x, 64 MiB) VMEM
        # so the derived block sizes are safe on every generation.
        return 64 << 20


def _pick_hw_block(HW, sub, itemsize, budget):
    """Largest 128-multiple divisor of HW such that `sub` rows fit in `budget`."""
    m = HW // 128
    k_max = max(1, budget // (sub * 128 * itemsize))
    for k in range(min(m, k_max), 0, -1):
        if m % k == 0:
            return 128 * k
    return 128


def _pick_t_block(T, row_bytes, sub, budget):
    """Largest T block (full T, or a multiple of `sub`) whose rows fit `budget`."""
    if T * row_bytes <= budget:
        return T
    t_blk = (budget // row_bytes) // sub * sub
    return int(min(T, max(sub, t_blk)))


def permute_bb(frames, bbox=None, ordering=ORDERING, *, max_block_bytes=None):
    """Pallas implementation of Permute_BB.forward for 4-D frames."""
    assert frames.ndim == 4, "Permute_BB kernel expects (C, T, H, W) frames"
    ordering = tuple(int(a) for a in ordering)
    assert tuple(sorted(ordering)) == (0, 1, 2, 3)
    # TODO(synk): orderings that move H/W (the sublane/lane axes) would need an
    # in-kernel transpose (pltpu.einshape); only leading-axis permutes handled.
    assert ordering[2:] == (2, 3), "only leading-axis permutations supported"

    C, T, H, W = frames.shape
    out4_shape = tuple(frames.shape[a] for a in ordering)

    # Degenerate cases: no data movement needed (torch.permute is a view, so a
    # passthrough / reshape is semantically equivalent and skips the HBM copy).
    if ordering == (0, 1, 2, 3):
        return frames, bbox
    if C == 1 or T == 1:
        return frames.reshape(out4_shape), bbox

    # From here on ordering == (1, 0, 2, 3): a (C, T) leading-axis swap.
    HW = H * W
    itemsize = jnp.dtype(frames.dtype).itemsize
    sub = _sublane(frames.dtype)

    vmem_cap = _vmem_capacity_bytes()
    if max_block_bytes is None:
        # ~VMEM/16 per block -> double-buffered in+out footprint ~= VMEM/4:
        # 8 MiB blocks on v5e/v6e (128 MiB VMEM), 4 MiB on v7x (64 MiB VMEM).
        max_block_bytes = min(8 << 20, vmem_cap // 16)

    cost = pl.CostEstimate(flops=0, transcendentals=0,
                           bytes_accessed=2 * frames.size * itemsize)

    x_in = frames.reshape(C, T, HW)

    if HW % 128 == 0:
        # Lane-dense path: output viewed as (T, C*HW) so every output block's
        # trailing dim is a (large) multiple of 128 -> unmasked lane-dense
        # stores and contiguous hw_blk-sized write-back bursts.
        hw_blk = int(_pick_hw_block(HW, sub, itemsize, max_block_bytes))
        t_blk = _pick_t_block(T, hw_blk * itemsize, sub, max_block_bytes)
        n_hw = HW // hw_blk
        n_t = _ceil_div(T, t_blk)
        # Give v7x's two TensorCores something to split when the grid is tiny.
        if C * n_t * n_hw < 4 and T >= 2 * sub:
            t_blk = _ceil_div(_ceil_div(T, 2), sub) * sub
            n_t = _ceil_div(T, t_blk)

        block_bytes = t_blk * hw_blk * itemsize
        grid = (C, n_t, n_hw)
        in_spec = pl.BlockSpec((None, t_blk, hw_blk), lambda c, t, h: (c, t, h))
        out_spec = pl.BlockSpec((t_blk, hw_blk),
                                lambda c, t, h: (t, c * n_hw + h))
        out_shape = jax.ShapeDtypeStruct((T, C * HW), frames.dtype)
    else:
        # Fallback (H*W not a multiple of 128): still collapse (H, W) -> HW so
        # every DMA burst is a full HW row (not W-sized slivers); blocks keep
        # the full trailing dim.
        # TODO(synk): for very small HW, an in-kernel leading-axis transpose
        # into a (t_blk, C*HW) slab (or an HBM->HBM strided DMA) would make the
        # write-back fully contiguous; kept as the simple strided copy here.
        t_blk = _pick_t_block(T, HW * itemsize, sub, max_block_bytes)
        n_t = _ceil_div(T, t_blk)
        if C * n_t < 4 and T >= 2 * sub:
            t_blk = _ceil_div(_ceil_div(T, 2), sub) * sub
            n_t = _ceil_div(T, t_blk)

        block_bytes = t_blk * HW * itemsize
        grid = (C, n_t)
        in_spec = pl.BlockSpec((None, t_blk, HW), lambda c, t: (c, t, 0))
        out_spec = pl.BlockSpec((t_blk, None, HW), lambda c, t: (t, c, 0))
        out_shape = jax.ShapeDtypeStruct((T, C, HW), frames.dtype)

    # Explicit scoped-VMEM limit: covers 2 in-bufs + 2 out-bufs + slack, so the
    # v5e 16 MiB default never bites, while staying well under physical VMEM
    # on every generation (capped at 90% of capacity).
    vmem_limit = min(int(vmem_cap * 9 // 10),
                     max(32 << 20, 4 * block_bytes + (4 << 20)))
    cparams = pltpu.CompilerParams(
        dimension_semantics=("parallel",) * len(grid),
        vmem_limit_bytes=vmem_limit,
    )

    out = pl.pallas_call(
        _copy_kernel,
        out_shape=out_shape,
        grid_spec=pltpu.PrefetchScalarGridSpec(
            num_scalar_prefetch=0,
            grid=grid,
            in_specs=[in_spec],
            out_specs=out_spec,
        ),
        compiler_params=cparams,
        cost_estimate=cost,
    )(x_in)

    return out.reshape(out4_shape), bbox


if __name__ == "__main__":
    key = jax.random.PRNGKey(0)
    k1, k2, k3, k4 = jax.random.split(key, 4)

    # 1) Main lane-dense path: (C, T, H, W) = (4, 8, 16, 16), H*W = 256.
    C, T, H, W = 4, 8, 16, 16
    frames = jax.random.normal(k1, (C, T, H, W), dtype=jnp.float32)
    bbox = jax.random.normal(k2, (T, 4), dtype=jnp.float32)  # passed through

    out_frames, out_bbox = permute_bb(frames, bbox, ORDERING)
    out_frames = jax.block_until_ready(out_frames)
    ref = jnp.transpose(frames, ORDERING)
    assert out_frames.shape == ref.shape
    assert jnp.array_equal(out_frames, ref)
    assert out_bbox is bbox

    # 2) Lane-dense path with forced HW blocking + ragged T blocks + bf16
    #    (exercises dtype-aware sublane rounding and the third grid axis).
    frames_bf16 = jax.random.normal(k3, (3, 40, 16, 16), dtype=jnp.bfloat16)
    out_bf16, _ = permute_bb(frames_bf16, None, ORDERING, max_block_bytes=4096)
    out_bf16 = jax.block_until_ready(out_bf16)
    assert jnp.array_equal(out_bf16, jnp.transpose(frames_bf16, ORDERING))

    # 3) Fallback path: H*W = 60, not a multiple of 128 (collapsed-HW blocks).
    frames_odd = jax.random.normal(k4, (4, 16, 6, 10), dtype=jnp.float32)
    out_odd, _ = permute_bb(frames_odd, None, ORDERING, max_block_bytes=2048)
    out_odd = jax.block_until_ready(out_odd)
    assert jnp.array_equal(out_odd, jnp.transpose(frames_odd, ORDERING))

    # 4) Degenerate cases take the no-copy path.
    ident, _ = permute_bb(frames, bbox, (0, 1, 2, 3))
    assert ident is frames
    single_c, _ = permute_bb(frames[:1], bbox, ORDERING)
    assert jnp.array_equal(single_c, jnp.transpose(frames[:1], ORDERING))

    print("KERNEL_OK")
</pallas_src>

<mosaic_0001>
module attributes {stable_mosaic.version = 11 : i64} {
  func.func @_copy_kernel(%arg0: i32, %arg1: i32, %arg2: i32, %arg3: memref<1x8x256xf32, #tpu.memory_space<vmem>>, %arg4: memref<8x256xf32, #tpu.memory_space<vmem>>) attributes {dimension_semantics = [#tpu.dimension_semantics<parallel>, #tpu.dimension_semantics<parallel>, #tpu.dimension_semantics<parallel>], iteration_bounds = array<i64: 4, 1, 1>, scalar_prefetch = 0 : i64, scratch_operands = 0 : i64, tpu.core_type = #tpu.core_type<tc>, window_params = [{transform_indices = @transform_0, window_bounds = array<i64: 1, 8, 256>}, {transform_indices = @transform_1, window_bounds = array<i64: 8, 256>}]} {
    %c0 = arith.constant 0 : index
    %c0_0 = arith.constant 0 : index
    %c0_1 = arith.constant 0 : index
    %0 = vector.load %arg3[%c0, %c0_0, %c0_1] : memref<1x8x256xf32, #tpu.memory_space<vmem>>, vector<1x8x256xf32>
    %1 = vector.shape_cast %0 : vector<1x8x256xf32> to vector<8x256xf32>
    %c0_2 = arith.constant 0 : index
    %c0_3 = arith.constant 0 : index
    %2 = vector.load %arg4[%c0_2, %c0_3] : memref<8x256xf32, #tpu.memory_space<vmem>>, vector<8x256xf32>
    tpu.vector_store %arg4[%c0_2, %c0_3], %1 {strides = array<i32>} : memref<8x256xf32, #tpu.memory_space<vmem>>, vector<8x256xf32>,
    return
  }
  func.func @transform_0(%arg0: i32, %arg1: i32, %arg2: i32) -> (i32, i32, i32) {
    %c0_i32 = arith.constant 0 : i32
    return %arg0, %arg1, %arg2 : i32, i32, i32
  }
  func.func @transform_1(%arg0: i32, %arg1: i32, %arg2: i32) -> (i32, i32) {
    %c1_i32 = arith.constant 1 : i32
    %0 = arith.muli %arg0, %c1_i32 : i32
    %1 = arith.addi %0, %arg2 : i32
    %c0_i32 = arith.constant 0 : i32
    return %arg1, %1 : i32, i32
  }
}

</mosaic_0001>

<llo_original>
// kernel: tpu_custom_call.1
$region0: #{tpu_custom_call.1}
  #allocation0 [shape = 'u32[]', space=smem, size = 0x4, offset = 0x4, fixed_abs, tag = 'smem constant byte address 0x4 - core index']
  #allocation1 [shape = 'u32[144,128]{1,0:T(1,128)}', space=vmem, size = 0x12000, scoped, tag = 'internal scratch']
  %s0 = inlined_call_operand.hbm [shape: f32[4,8,256], index: 0, kind: input, shape index: {}]
  %s1 = inlined_call_operand.hbm [shape: f32[8,1024], index: 1, kind: output, shape index: {}]
  %s2 = sld [smem:[#allocation0]]
  $region41: #{tpu_custom_call.1} parent=0
    _
  %s4 = ssub.s32 1, %s2
  %s5 = scalar_select 0, %s4, %s2
  $region1: #{tpu_custom_call.1} parent=0
    #allocation2 [shape = 'u8[16384]{0}', space=vmem, size = 0x4000, scoped, tag = 'input window, operand 0']
    #allocation3 [shape = 's32[2]{0}', space=sflag, size = 0x8, scoped, tag = 'scoped memory for tpu_custom_call.1']
    #allocation4 [shape = 's32[2]{0}', space=sflag, size = 0x8, scoped, tag = 'scoped memory for tpu_custom_call.1']
    #allocation5 [shape = 'u8[16384]{0}', space=vmem, size = 0x4000, scoped, tag = 'output window, operand 0']
    %6 = vsyncpa [#allocation3], 0
    %s7 = scalar_lea.sflag [#allocation3], 1
    %8 = vsyncpa %s7, 0
    %9 = vsyncpa [#allocation4], 0
    %s10 = scalar_lea.sflag [#allocation4], 1
    %11 = vsyncpa %s10, 0
    loop: start=0, step=1, limit=6
    $region2: #{tpu_custom_call.1} parent=1 // loop_pre_header
      _
    $region3: #{tpu_custom_call.1} parent=1 // loop_header
      %s13 = sphi 0, %s17
      %p14 = scmp.ge.s32.totalorder %s13, 6
      %s20 = sphi 0, %s39
      %s21 = sphi 0, %s35
      %s22 = sphi 0, %s31
      %s23 = sphi 0, %s20
      %s24 = sphi 0, %s21
      %s25 = sphi 0, %s22
      %s26 = sphi 0, %s23
      %s27 = sphi 0, %s24
      %s28 = sphi 0, %s25
      %s46 = sphi 0, %s48
      %s49 = sphi 0, %s46
      %s50 = sphi 0, %s49
      %s66 = sphi 0, %s50
      %s76 = sphi 0, %s78
      %s79 = sphi 0, %s76
      %s80 = sphi 0, %s79
      %s96 = sphi 0, %s80
    $region4: #{tpu_custom_call.1} parent=1 // loop_header_branch
      %16 = sbr.rel (%p14) target = $region8
    $region5: #{tpu_custom_call.1} parent=1 // loop_body
      %s18 = ssub.s32 %s13, 1
      %s19 = ssub.s32 %s13, 2
      %s29 = sadd.s32 1, %s22
      %p30 = scmp.ge.s32.totalorder %s29, 1
      %s31 = scalar_select %p30, 0, %s29
      %s32 = sadd.s32 1, %s21
      %s33 = scalar_select %p30, %s32, %s21
      %p34 = scmp.ge.s32.totalorder %s33, 1
      %s35 = scalar_select %p34, 0, %s33
      %s36 = sadd.s32 1, %s20
      %s37 = scalar_select %p34, %s36, %s20
      %p38 = scmp.ge.s32.totalorder %s37, 4
      %s39 = scalar_select %p38, 0, %s37
      %s40 = ssub.s32 %s20, %s39
      %s41 = ssub.s32 %s21, %s35
      %s42 = sor.u32 %s40, %s41
      %s43 = ssub.s32 %s22, %s31
      %s44 = sor.u32 %s42, %s43
      %p45 = scmp.eq.s32.totalorder %s44, 0
      %s47 = sadd.s32 %s46, 1
      %s48 = scalar_select %p45, %s46, %s47
      %p51 = pneg %p45
      %p52 = scmp.eq.s32.totalorder %s13, 3
      %p53 = por %p51, %p52
      %p54 = scmp.ne.s32.totalorder %s46, %s49
      %p55 = scmp.eq.s32.totalorder %s13, 0
      %p56 = por %p54, %p55
      %p57 = scmp.ne.s32.totalorder %s46, %s49
      %p58 = scmp.eq.s32.totalorder %s18, 3
      %p59 = por %p57, %p58
      %p60 = scmp.ne.s32.totalorder %s49, %s50
      %p61 = scmp.eq.s32.totalorder %s18, 0
      %p62 = por %p60, %p61
      %p63 = scmp.ne.s32.totalorder %s49, %s50
      %p64 = scmp.eq.s32.totalorder %s19, 3
      %p65 = por %p63, %p64
      %p67 = scmp.ne.s32.totalorder %s50, %s66
      %p68 = scmp.eq.s32.totalorder %s19, 0
      %p69 = por %p67, %p68
      %s70 = sadd.s32 %s20, %s22
      %s71 = sadd.s32 %s39, %s31
      %s72 = ssub.s32 %s21, %s35
      %s73 = ssub.s32 %s70, %s71
      %s74 = sor.u32 %s72, %s73
      %p75 = scmp.eq.s32.totalorder %s74, 0
      %s77 = sadd.s32 %s76, 1
      %s78 = scalar_select %p75, %s76, %s77
      %p81 = pneg %p75
      %p82 = scmp.eq.s32.totalorder %s13, 3
      %p83 = por %p81, %p82
      %p84 = scmp.ne.s32.totalorder %s76, %s79
      %p85 = scmp.eq.s32.totalorder %s13, 0
      %p86 = por %p84, %p85
      %p87 = scmp.ne.s32.totalorder %s76, %s79
      %p88 = scmp.eq.s32.totalorder %s18, 3
      %p89 = por %p87, %p88
      %p90 = scmp.ne.s32.totalorder %s79, %s80
      %p91 = scmp.eq.s32.totalorder %s18, 0
      %p92 = por %p90, %p91
      %p93 = scmp.ne.s32.totalorder %s79, %s80
      %p94 = scmp.eq.s32.totalorder %s19, 3
      %p95 = por %p93, %p94
      %p97 = scmp.ne.s32.totalorder %s80, %s96
      %p98 = scmp.eq.s32.totalorder %s19, 0
      %p99 = por %p97, %p98
      %p100 = scmp.le.s32.totalorder 1, %s13
      %p101 = scmp.lt.s32.totalorder %s13, 5
      %p102 = pnand %p100, %p101
      %p103 = pneg %p102
      // Predicated region
      $region9: #{tpu_custom_call.1} parent=5 // pred_check
        _
      $region10: #{tpu_custom_call.1} parent=5 // pred_check_branch
        %105 = sbr.rel (%p102) target = $region12
      $region11: #{tpu_custom_call.1} parent=5 // pred_region
        %s106 = ssub.s32 %s13, 1
      $region12: #{tpu_custom_call.1} parent=5 // pred_fallthru
        _
      %p107 = scmp.lt.s32.totalorder %s13, 4
      // Predicated region
      $region13: #{tpu_custom_call.1} parent=5 // pred_check
        %p108 = pneg %p107
      $region14: #{tpu_custom_call.1} parent=5 // pred_check_branch
        %110 = sbr.rel (%p108) target = $region16
      $region15: #{tpu_custom_call.1} parent=5 // pred_region
        // Predicated region
        $region17: #{tpu_custom_call.1} parent=15 // pred_check
          %p111 = pneg %p56
        $region18: #{tpu_custom_call.1} parent=15 // pred_check_branch
          %113 = sbr.rel (%p111) target = $region20
        $region19: #{tpu_custom_call.1} parent=15 // pred_region
          %s114 = sand.u32 %s46, 1
          %s115 = scalar_lea.sflag [#allocation3], %s114
          %s116 = sand.u32 %s46, 1
          %s117 = smul.addr %s116, 16
          %s118 = scalar_lea.vmem [#allocation2], %s117
          %s119 = smul.u32 2, %s22
          %s121 = ssub.s32 256, 256
          %122 = vsyncadd %s115, %s121
          %s123 = smul.addr %s21, 2
          %s124 = sadd.s32 %s119, %s123
          %s125 = smul.addr %s20, 2
          %s126 = sadd.s32 %s124, %s125
          %s127 = smul.addr %s126, 128
          %s128 = scalar_lea.hbm %s0, %s127
          %s130 = sshll.u32 %s118, 4
          %s131 = int_to_ptr.vmem [resolvable:$true] %s130
          %133 = dma.hbm_to_vmem [thread:$0]  %s128, 256, %s131, %s115
        $region20: #{tpu_custom_call.1} parent=15 // pred_fallthru
          _
      $region16: #{tpu_custom_call.1} parent=5 // pred_fallthru
        _
      %p134 = scmp.le.s32.totalorder 1, %s13
      %p135 = scmp.lt.s32.totalorder %s13, 5
      %p136 = pnand %p134, %p135
      %p137 = pneg %p136
      // Predicated region
      $region21: #{tpu_custom_call.1} parent=5 // pred_check
        _
      $region22: #{tpu_custom_call.1} parent=5 // pred_check_branch
        %139 = sbr.rel (%p136) target = $region24
      $region23: #{tpu_custom_call.1} parent=5 // pred_region
        %s140 = ssub.s32 %s13, 1
        %s141 = sand.u32 %s49, 1
        %s142 = scalar_lea.sflag [#allocation3], %s141
        %s143 = sand.u32 %s49, 1
        %s144 = smul.addr %s143, 16
        %s145 = scalar_lea.vmem [#allocation2], %s144
        // Predicated region
        $region25: #{tpu_custom_call.1} parent=23 // pred_check
          %p146 = pneg %p62
        $region26: #{tpu_custom_call.1} parent=23 // pred_check_branch
          %148 = sbr.rel (%p146) target = $region28
        $region27: #{tpu_custom_call.1} parent=23 // pred_region
          %149 = dma.done %s142, 256
        $region28: #{tpu_custom_call.1} parent=23 // pred_fallthru
          _
        %s150 = sand.u32 %s49, 1
        %s151 = scalar_lea.sflag [#allocation3], %s150
        %s152 = sand.u32 %s49, 1
        %s153 = smul.addr %s152, 16
        %s154 = scalar_lea.vmem [#allocation2], %s153
        %p155 = pneg %p62
        %p156 = pneg %p59
        %p157 = pneg %p92
        %p158 = pneg %p89
        %s159 = sand.u32 %s79, 1
        %s160 = scalar_lea.sflag [#allocation4], %s159
        %s161 = sand.u32 %s79, 1
        %s162 = smul.addr %s161, 16
        %s163 = scalar_lea.vmem [#allocation5], %s162
        %s164 = smul.u32 2, %s25
        %s165 = sadd.s32 %s23, %s25
        %s166 = smul.u32 2, %s165
        %v167 = vld [vmem:[%s145] sm:$0xff]
        %v168 = vld [vmem:[%s145 + $0x8] sm:$0xff]
        %169 = vst [vmem:[%s163] sm:$0xff] %v167
        %170 = vst [vmem:[%s163 + $0x8] sm:$0xff] %v168
        %s171 = sand.u32 %s79, 1
        %s172 = scalar_lea.sflag [#allocation4], %s171
        %s173 = sand.u32 %s79, 1
        %s174 = smul.addr %s173, 16
        %s175 = scalar_lea.vmem [#allocation5], %s174
        // Predicated region
        $region29: #{tpu_custom_call.1} parent=23 // pred_check
          %p176 = pneg %p89
        $region30: #{tpu_custom_call.1} parent=23 // pred_check_branch
          %178 = sbr.rel (%p176) target = $region32
        $region31: #{tpu_custom_call.1} parent=23 // pred_region
          %s179 = sadd.s32 %s23, %s25
          %s180 = smul.u32 2, %s179
          %s182 = ssub.s32 256, 256
          %183 = vsyncadd %s172, %s182
          %s184 = smul.addr %s24, 8
          %s185 = sadd.s32 %s180, %s184
          %s186 = smul.addr %s185, 128
          %s187 = scalar_lea.hbm %s1, %s186
          %s189 = sshll.u32 %s175, 4
          %s190 = int_to_ptr.vmem [resolvable:$true] %s189
          %192 = dma.vmem_to_hbm [thread:$0]  %s190, 256, %s187, %s172
        $region32: #{tpu_custom_call.1} parent=23 // pred_fallthru
          _
      $region24: #{tpu_custom_call.1} parent=5 // pred_fallthru
        _
      %p193 = scmp.le.s32.totalorder 2, %s13
      // Predicated region
      $region33: #{tpu_custom_call.1} parent=5 // pred_check
        %p194 = pneg %p193
      $region34: #{tpu_custom_call.1} parent=5 // pred_check_branch
        %196 = sbr.rel (%p194) target = $region36
      $region35: #{tpu_custom_call.1} parent=5 // pred_region
        %s197 = ssub.s32 %s13, 2
        // Predicated region
        $region37: #{tpu_custom_call.1} parent=35 // pred_check
          %p198 = pneg %p95
        $region38: #{tpu_custom_call.1} parent=35 // pred_check_branch
          %200 = sbr.rel (%p198) target = $region40
        $region39: #{tpu_custom_call.1} parent=35 // pred_region
          %s201 = sand.u32 %s80, 1
          %s202 = scalar_lea.sflag [#allocation4], %s201
          %s203 = sand.u32 %s80, 1
          %s204 = smul.addr %s203, 16
          %s205 = scalar_lea.vmem [#allocation5], %s204
          %206 = dma.done %s202, 256
        $region40: #{tpu_custom_call.1} parent=35 // pred_fallthru
          _
      $region36: #{tpu_custom_call.1} parent=5 // pred_fallthru
        _
    $region6: #{tpu_custom_call.1} parent=1 // loop_footer
      %s17 = sadd.s32 1, %s13
    $region7: #{tpu_custom_call.1} parent=1 // loop_footer_branch
      %12 = sbr.rel target = $region3
    $region8: #{tpu_custom_call.1} parent=1 // loop_exit
      _
    %207 = vsyncpa [#allocation3], 1
    %s208 = scalar_lea.sflag [#allocation3], 1
    %209 = vsyncpa %s208, 1
    %210 = vsyncpa [#allocation4], 1
    %s211 = scalar_lea.sflag [#allocation4], 1
    %212 = vsyncpa %s211, 1

</llo_original>
